<compile_context>
chip_gen: v7x
topology: tpu7x:2x2x1
jax: 0.10.0
libtpu: 0.0.40
codegen_flags: <defaults>
</compile_context>

<pallas_src>
import functools

import jax
import jax.numpy as jnp
from jax import lax
from jax.experimental import pallas as pl
from jax.experimental.pallas import tpu as pltpu


# ---------------------------------------------------------------------------
# Generation-aware VMEM sizing
# ---------------------------------------------------------------------------
def _vmem_capacity_bytes():
    try:
        info = pltpu.get_tpu_info()
        cap = int(getattr(info, "vmem_capacity_bytes", 0) or 0)
        if cap > 0:
            return cap
    except Exception:
        pass
    # Safe default: v7x per-TensorCore physical VMEM (smallest of the family).
    return 64 * 1024 * 1024


_VMEM_CAP = _vmem_capacity_bytes()
# Explicit scoped-VMEM limit for the kernels: above the per-generation scoped
# defaults, well below physical capacity everywhere (v5e/v6e 128 MiB, v7x 64).
_VMEM_LIMIT = min((_VMEM_CAP * 3) // 4, 48 * 1024 * 1024)
# Per-block byte target: bigger blocks on the 128 MiB-VMEM parts (v5e/v6e).
_BLOCK_CAP = 6 * 1024 * 1024 if _VMEM_CAP >= 100 * 1024 * 1024 else 4 * 1024 * 1024


def _cdiv(a, b):
    return -(-a // b)


def _round_down(x, m):
    return (x // m) * m


def _block_bytes(n_streams):
    # n_streams big arrays, double-buffered, plus headroom for the tiny
    # accumulator / semaphores.
    return max(512 * 1024, min(_BLOCK_CAP, _VMEM_LIMIT // (2 * n_streams + 2)))


# ---------------------------------------------------------------------------
# In-kernel helpers
# ---------------------------------------------------------------------------
def _row_thresholds(thr_ref, b0, bB, ndim):
    """(bB, 1[, 1]) int32 vector with thr_ref[b0 + i] in row i.

    bB is a small static constant (<= 8); thr_ref is the scalar-prefetched
    SMEM array of per-sample thresholds.
    """
    shape = (bB,) + (1,) * (ndim - 1)
    if bB == 1:
        return jnp.full(shape, thr_ref[b0], jnp.int32)
    ridx = lax.broadcasted_iota(jnp.int32, shape, 0)
    thr = jnp.zeros(shape, jnp.int32)
    for i in range(bB):                       # static, tiny unrolled loop
        thr = jnp.where(ridx == i, thr_ref[b0 + i], thr)
    return thr


# ---------------------------------------------------------------------------
# Kernels: native (B, T, D) layout (D % 128 == 0 and T >= 8)
# ---------------------------------------------------------------------------
def _sum3d_kernel(thr_ref, x_ref, y_ref, acc_ref):
    """Accumulate masked squared error into a resident (8, D) f32 slab."""
    t = pl.program_id(1)
    bB, tT, D = x_ref.shape

    @pl.when(t == 0)
    def _():
        acc_ref[...] = jnp.zeros_like(acc_ref)

    diff = x_ref[...].astype(jnp.float32) - y_ref[...].astype(jnp.float32)
    sq = diff * diff
    row = lax.broadcasted_iota(jnp.int32, (bB, tT, 1), 1)
    thr = _row_thresholds(thr_ref, pl.program_id(0) * bB, bB, 3) - t * tT
    m = jnp.where(row < thr, sq, 0.0)
    # Layout-preserving reshape: each group of 8 time rows maps 1:1 onto vregs,
    # so the axis-0 sum is pure vreg-to-vreg VPU adds (no XLU, no full-tile
    # accumulator load/store).  tT is always a multiple of 8 by construction.
    acc_ref[...] += m.reshape(bB * (tT // 8), 8, D).sum(axis=0)


def _none3d_kernel(thr_ref, x_ref, y_ref, out_ref):
    t = pl.program_id(1)
    bB, tT, _ = x_ref.shape
    diff = x_ref[...].astype(jnp.float32) - y_ref[...].astype(jnp.float32)
    sq = diff * diff
    row = lax.broadcasted_iota(jnp.int32, (bB, tT, 1), 1)
    thr = _row_thresholds(thr_ref, pl.program_id(0) * bB, bB, 3) - t * tT
    out_ref[...] = jnp.where(row < thr, sq, 0.0).astype(out_ref.dtype)


# ---------------------------------------------------------------------------
# Kernels: lane-dense flattened (B, T*D) layout (D % 128 != 0 or T < 8)
# ---------------------------------------------------------------------------
def _sumflat_kernel(thr_ref, x_ref, y_ref, psum_ref):
    t = pl.program_id(1)
    bB, tF = x_ref.shape

    @pl.when(t == 0)
    def _():
        psum_ref[...] = jnp.zeros_like(psum_ref)

    diff = x_ref[...].astype(jnp.float32) - y_ref[...].astype(jnp.float32)
    sq = diff * diff
    col = lax.broadcasted_iota(jnp.int32, (bB, tF), 1)
    # thresholds are pre-scaled to column units (length * D) in the wrapper
    thr = _row_thresholds(thr_ref, pl.program_id(0) * bB, bB, 2) - t * tF
    m = jnp.where(col < thr, sq, 0.0)
    total = jnp.sum(m)
    psum_ref[...] += jnp.full(psum_ref.shape, total, dtype=psum_ref.dtype)


def _noneflat_kernel(thr_ref, x_ref, y_ref, out_ref):
    t = pl.program_id(1)
    bB, tF = x_ref.shape
    diff = x_ref[...].astype(jnp.float32) - y_ref[...].astype(jnp.float32)
    sq = diff * diff
    col = lax.broadcasted_iota(jnp.int32, (bB, tF), 1)
    thr = _row_thresholds(thr_ref, pl.program_id(0) * bB, bB, 2) - t * tF
    out_ref[...] = jnp.where(col < thr, sq, 0.0).astype(out_ref.dtype)


# ---------------------------------------------------------------------------
# Wrapper
# ---------------------------------------------------------------------------
@functools.partial(jax.jit, static_argnames=("reduction",))
def reconstruction_loss(inp, tgt, length=None, *, reduction="mean"):
    if reduction not in ("mean", "sum", "none"):
        raise ValueError(f"{reduction} is not supported as reduction.")

    B, T, D = inp.shape
    itemsize = jnp.dtype(inp.dtype).itemsize
    if length is None:
        length = jnp.full((B,), T, dtype=jnp.int32)
    # Clamp here so the kernels never need total_t / total_b edge masks.
    length = jnp.clip(length.astype(jnp.int32), 0, T)          # (B,)

    n_streams = 3 if reduction == "none" else 2
    budget = _block_bytes(n_streams)
    vmem_limit = int(_VMEM_LIMIT)

    use_3d = (D % 128 == 0) and (T >= 8)

    if use_3d:
        # -------- native (B, T, D) path --------
        per_sample = T * D * itemsize
        if per_sample >= 128 * 1024 or B < 4:
            bB = 1                     # biggest tT, no batch packing (v5e)
        else:
            # Pack small samples, but keep >= 2 parallel batch blocks for v7x
            # megacore and <= 8 rows for the cheap threshold build.
            bB = max(1, min(8, B // 2, budget // max(1, per_sample)))
        rows = budget // max(1, bB * D * itemsize)
        tT = max(8, min(_round_down(T, 8), _round_down(rows, 8)))
        nB = _cdiv(B, bB)
        nT = _cdiv(T, tT)
        thr = jnp.pad(length, (0, nB * bB - B))                 # zero-padded

        xy_spec = pl.BlockSpec((bB, tT, D), lambda b, t, thr_ref: (b, t, 0))
        cost = pl.CostEstimate(flops=3 * B * T * D, transcendentals=0,
                               bytes_accessed=int(n_streams * B * T * D * itemsize))

        if reduction == "none":
            return pl.pallas_call(
                _none3d_kernel,
                out_shape=jax.ShapeDtypeStruct((B, T, D), inp.dtype),
                grid_spec=pltpu.PrefetchScalarGridSpec(
                    num_scalar_prefetch=1, grid=(nB, nT),
                    in_specs=[xy_spec, xy_spec],
                    out_specs=pl.BlockSpec((bB, tT, D),
                                           lambda b, t, thr_ref: (b, t, 0))),
                compiler_params=pltpu.CompilerParams(
                    dimension_semantics=("parallel", "parallel"),
                    vmem_limit_bytes=vmem_limit),
                cost_estimate=cost,
            )(thr, inp, tgt)

        psum = pl.pallas_call(
            _sum3d_kernel,
            out_shape=jax.ShapeDtypeStruct((nB * 8, D), jnp.float32),
            grid_spec=pltpu.PrefetchScalarGridSpec(
                num_scalar_prefetch=1, grid=(nB, nT),
                in_specs=[xy_spec, xy_spec],
                out_specs=pl.BlockSpec((8, D), lambda b, t, thr_ref: (b, 0))),
            compiler_params=pltpu.CompilerParams(
                dimension_semantics=("parallel", "arbitrary"),
                vmem_limit_bytes=vmem_limit),
            cost_estimate=cost,
        )(thr, inp, tgt)
        loss_sum = jnp.sum(psum)
    else:
        # -------- lane-dense flattened (B, T*D) path --------
        F = T * D
        x2 = inp.reshape(B, F)
        y2 = tgt.reshape(B, F)
        bB = B if B <= 8 else 8
        nB = _cdiv(B, bB)
        cols = budget // max(1, bB * itemsize)
        if F <= 128:
            tF = F
        else:
            tF = max(128, min(_round_down(F, 128), _round_down(cols, 128)))
        nF = _cdiv(F, tF)
        # thresholds in flat-column units; zero-pad for edge batch blocks
        thr = jnp.pad(length * D, (0, nB * bB - B))

        xy_spec = pl.BlockSpec((bB, tF), lambda b, f, thr_ref: (b, f))
        cost = pl.CostEstimate(flops=3 * B * F, transcendentals=0,
                               bytes_accessed=int(n_streams * B * F * itemsize))

        if reduction == "none":
            out = pl.pallas_call(
                _noneflat_kernel,
                out_shape=jax.ShapeDtypeStruct((B, F), inp.dtype),
                grid_spec=pltpu.PrefetchScalarGridSpec(
                    num_scalar_prefetch=1, grid=(nB, nF),
                    in_specs=[xy_spec, xy_spec],
                    out_specs=pl.BlockSpec((bB, tF),
                                           lambda b, f, thr_ref: (b, f))),
                compiler_params=pltpu.CompilerParams(
                    dimension_semantics=("parallel", "parallel"),
                    vmem_limit_bytes=vmem_limit),
                cost_estimate=cost,
            )(thr, x2, y2)
            return out.reshape(B, T, D)

        psum = pl.pallas_call(
            _sumflat_kernel,
            out_shape=jax.ShapeDtypeStruct((nB, 1, 128), jnp.float32),
            grid_spec=pltpu.PrefetchScalarGridSpec(
                num_scalar_prefetch=1, grid=(nB, nF),
                in_specs=[xy_spec, xy_spec],
                out_specs=pl.BlockSpec((1, 1, 128),
                                       lambda b, f, thr_ref: (b, 0, 0))),
            compiler_params=pltpu.CompilerParams(
                dimension_semantics=("parallel", "arbitrary"),
                vmem_limit_bytes=vmem_limit),
            cost_estimate=cost,
        )(thr, x2, y2)
        loss_sum = jnp.sum(psum[:, 0, 0])

    if reduction == "sum":
        return loss_sum
    # mean: sum / (embedding_dim * non_padding_count).  Divides by zero
    # (-> inf/nan) when every frame is padded, matching the PyTorch module.
    non_pad = jnp.sum(length.astype(jnp.float32))
    return loss_sum / (jnp.float32(D) * non_pad)


# ---------------------------------------------------------------------------
# Reference (pure JAX) for verification
# ---------------------------------------------------------------------------
def reconstruction_loss_ref(inp, tgt, length=None, reduction="mean"):
    B, T, D = inp.shape
    if length is None:
        length = jnp.full((B,), T, dtype=jnp.int32)
    padding_mask = jnp.arange(T)[None, :] >= length[:, None]          # (B, T)
    loss = (inp.astype(jnp.float32) - tgt.astype(jnp.float32)) ** 2
    loss = jnp.where(padding_mask[:, :, None], 0.0, loss)
    if reduction == "mean":
        non_pad = jnp.sum(jnp.logical_not(padding_mask).astype(jnp.float32))
        return jnp.sum(loss) / (D * non_pad)
    if reduction == "sum":
        return jnp.sum(loss)
    return loss.astype(inp.dtype)


# ---------------------------------------------------------------------------
if __name__ == "__main__":
    key = jax.random.PRNGKey(0)
    keys = jax.random.split(key, 8)
    failures = []

    def check(name, x, y, length, reduction):
        got = jax.block_until_ready(
            reconstruction_loss(x, y, length, reduction=reduction))
        want = reconstruction_loss_ref(x, y, length, reduction=reduction)
        if not jnp.allclose(got, want, rtol=1e-5, atol=1e-5):
            failures.append(name)

    # Case 1: native 3-D path (D % 128 == 0), single time block.
    B, T, D = 2, 16, 128
    x = jax.random.normal(keys[0], (B, T, D), dtype=jnp.float32)
    y = jax.random.normal(keys[1], (B, T, D), dtype=jnp.float32)
    length = jnp.array([16, 9], dtype=jnp.int32)
    for red in ("mean", "sum", "none"):
        check(f"3d small {red}", x, y, length, red)
    check("3d length=None mean", x, y, None, "mean")

    # Case 2: native 3-D path with T not a multiple of the time tile
    # (exercises accumulation across time blocks + edge-row masking).
    B, T, D = 3, 20, 128
    x = jax.random.normal(keys[2], (B, T, D), dtype=jnp.float32)
    y = jax.random.normal(keys[3], (B, T, D), dtype=jnp.float32)
    length = jnp.array([13, 20, 7], dtype=jnp.int32)
    for red in ("mean", "sum", "none"):
        check(f"3d edge {red}", x, y, length, red)

    # Case 3: lane-dense flattened path (D=32 is not a lane multiple).
    B, T, D = 2, 8, 32
    x = jax.random.normal(keys[4], (B, T, D), dtype=jnp.float32)
    y = jax.random.normal(keys[5], (B, T, D), dtype=jnp.float32)
    length = jnp.array([8, 5], dtype=jnp.int32)
    for red in ("mean", "sum", "none"):
        check(f"flat small {red}", x, y, length, red)

    # Case 4: flattened path where T*D is not a multiple of 128
    # (partial lane-edge blocks + accumulation across F blocks, bB=3).
    B, T, D = 3, 20, 24
    x = jax.random.normal(keys[6], (B, T, D), dtype=jnp.float32)
    y = jax.random.normal(keys[7], (B, T, D), dtype=jnp.float32)
    length = jnp.array([11, 20, 3], dtype=jnp.int32)
    for red in ("mean", "sum", "none"):
        check(f"flat edge {red}", x, y, length, red)

    if failures:
        for f in failures:
            print("MISMATCH:", f)
    else:
        print("KERNEL_OK")
</pallas_src>

<mosaic_0001>
module attributes {stable_mosaic.version = 11 : i64} {
  func.func @_sum3d_kernel(%arg0: i32, %arg1: i32, %arg2: memref<2xi32, #tpu.memory_space<smem>>, %arg3: memref<1x16x128xf32, #tpu.memory_space<vmem>>, %arg4: memref<1x16x128xf32, #tpu.memory_space<vmem>>, %arg5: memref<8x128xf32, #tpu.memory_space<vmem>>) attributes {dimension_semantics = [#tpu.dimension_semantics<parallel>, #tpu.dimension_semantics<arbitrary>], iteration_bounds = array<i64: 2, 1>, scalar_prefetch = 1 : i64, scratch_operands = 0 : i64, tpu.core_type = #tpu.core_type<tc>, window_params = [{transform_indices = @transform_0, window_bounds = array<i64: 1, 16, 128>}, {transform_indices = @transform_1, window_bounds = array<i64: 1, 16, 128>}, {transform_indices = @transform_2, window_bounds = array<i64: 8, 128>}]} {
    %c0_i32 = arith.constant 0 : i32
    %0 = arith.cmpi eq, %arg1, %c0_i32 : i32
    %1 = arith.extui %0 : i1 to i32
    %c0_i32_0 = arith.constant 0 : i32
    %2 = arith.cmpi ne, %1, %c0_i32_0 : i32
    scf.if %2 {
      %cst_11 = arith.constant 0.000000e+00 : f32
      %26 = vector.broadcast %cst_11 : f32 to vector<8x128xf32>
      %c0_12 = arith.constant 0 : index
      %c0_13 = arith.constant 0 : index
      %27 = vector.load %arg5[%c0_12, %c0_13] : memref<8x128xf32, #tpu.memory_space<vmem>>, vector<8x128xf32>
      tpu.vector_store %arg5[%c0_12, %c0_13], %26 {strides = array<i32>} : memref<8x128xf32, #tpu.memory_space<vmem>>, vector<8x128xf32>,
    } else {
    }
    %c0 = arith.constant 0 : index
    %c0_1 = arith.constant 0 : index
    %c0_2 = arith.constant 0 : index
    %3 = vector.load %arg3[%c0, %c0_1, %c0_2] : memref<1x16x128xf32, #tpu.memory_space<vmem>>, vector<1x16x128xf32>
    %c0_3 = arith.constant 0 : index
    %c0_4 = arith.constant 0 : index
    %c0_5 = arith.constant 0 : index
    %4 = vector.load %arg4[%c0_3, %c0_4, %c0_5] : memref<1x16x128xf32, #tpu.memory_space<vmem>>, vector<1x16x128xf32>
    %5 = arith.subf %3, %4 : vector<1x16x128xf32>
    %6 = arith.mulf %5, %5 : vector<1x16x128xf32>
    %7 = tpu.iota {dimensions = array<i32: 1>} : vector<1x16x1xi32>
    %c1_i32 = arith.constant 1 : i32
    %8 = arith.muli %arg0, %c1_i32 : i32
    %9 = arith.index_cast %8 : i32 to index
    %10 = memref.load %arg2[%9] : memref<2xi32, #tpu.memory_space<smem>>
    %11 = vector.broadcast %10 : i32 to vector<1x1x1xi32>
    %c16_i32 = arith.constant 16 : i32
    %12 = arith.muli %arg1, %c16_i32 : i32
    %13 = vector.broadcast %12 : i32 to vector<1x1x1xi32>
    %14 = arith.subi %11, %13 : vector<1x1x1xi32>
    %15 = vector.broadcast %14 : vector<1x1x1xi32> to vector<1x16x1xi32>
    %16 = arith.cmpi slt, %7, %15 : vector<1x16x1xi32>
    %cst = arith.constant 0.000000e+00 : f32
    %17 = vector.shape_cast %16 : vector<1x16x1xi1> to vector<1x16x1xi1>
    %18 = vector.broadcast %17 : vector<1x16x1xi1> to vector<1x16x128xi1>
    %19 = vector.broadcast %cst : f32 to vector<1x16x128xf32>
    %20 = arith.select %18, %6, %19 : vector<1x16x128xi1>, vector<1x16x128xf32>
    %c0_6 = arith.constant 0 : index
    %c0_7 = arith.constant 0 : index
    %21 = vector.load %arg5[%c0_6, %c0_7] : memref<8x128xf32, #tpu.memory_space<vmem>>, vector<8x128xf32>
    %22 = vector.shape_cast %20 : vector<1x16x128xf32> to vector<2x8x128xf32>
    %cst_8 = arith.constant dense<0.000000e+00> : vector<8x128xf32>
    %23 = vector.multi_reduction <add>, %22, %cst_8 [0] : vector<2x8x128xf32> to vector<8x128xf32>
    %24 = arith.addf %21, %23 : vector<8x128xf32>
    %c0_9 = arith.constant 0 : index
    %c0_10 = arith.constant 0 : index
    %25 = vector.load %arg5[%c0_9, %c0_10] : memref<8x128xf32, #tpu.memory_space<vmem>>, vector<8x128xf32>
    tpu.vector_store %arg5[%c0_9, %c0_10], %24 {strides = array<i32>} : memref<8x128xf32, #tpu.memory_space<vmem>>, vector<8x128xf32>,
    return
  }
  func.func @transform_0(%arg0: i32, %arg1: i32, %arg2: memref<2xi32, #tpu.memory_space<smem>>) -> (i32, i32, i32) {
    %c0_i32 = arith.constant 0 : i32
    %c0_i32_0 = arith.constant 0 : i32
    return %arg0, %arg1, %c0_i32 : i32, i32, i32
  }
  func.func @transform_1(%arg0: i32, %arg1: i32, %arg2: memref<2xi32, #tpu.memory_space<smem>>) -> (i32, i32, i32) {
    %c0_i32 = arith.constant 0 : i32
    %c0_i32_0 = arith.constant 0 : i32
    return %arg0, %arg1, %c0_i32 : i32, i32, i32
  }
  func.func @transform_2(%arg0: i32, %arg1: i32, %arg2: memref<2xi32, #tpu.memory_space<smem>>) -> (i32, i32) {
    %c0_i32 = arith.constant 0 : i32
    %c0_i32_0 = arith.constant 0 : i32
    return %arg0, %c0_i32 : i32, i32
  }
}

</mosaic_0001>

<llo_original>
// kernel: reconstruction_loss.1
$region0: #{reconstruction_loss.1}
  #allocation0 [shape = 'u32[]', space=smem, size = 0x4, offset = 0x4, fixed_abs, tag = 'smem constant byte address 0x4 - core index']
  #allocation1 [shape = 'u32[144,128]{1,0:T(1,128)}', space=vmem, size = 0x12000, scoped, tag = 'internal scratch']
  #allocation2 [shape = 's32[1]{0}', space=sflag, size = 0x4, scoped, tag = 'scoped memory for reconstruction_loss.1']
  #allocation3 [shape = 'u8[512]{0}', space=smem, size = 0x200, scoped, tag = 'prefetched SMEM operand 0']
  %s0 = inlined_call_operand.vmem [shape: s32[2], index: 0, kind: input, shape index: {}]
  %s1 = inlined_call_operand.hbm [shape: f32[2,16,128], index: 1, kind: input, shape index: {}]
  %s2 = inlined_call_operand.hbm [shape: f32[2,16,128], index: 2, kind: input, shape index: {}]
  %s3 = inlined_call_operand.vmem [shape: f32[16,128], index: 3, kind: output, shape index: {}]
  %s4 = sld [smem:[#allocation0]]
  $region53: #{reconstruction_loss.1} parent=0
    _
  %s6 = ssub.s32 1, %s4
  %s7 = scalar_select 0, %s6, %s4
  %s8 = sshll.u32 %s0, 4
  %s9 = int_to_ptr.vmem [resolvable:$true] %s8
  %11 = dma.vmem_to_smem %s9, 16, [#allocation3], [#allocation2]
  %12 = dma.done [#allocation2], 16
  %13 = sfence
  $region1: #{reconstruction_loss.1} parent=0
    #allocation4 [shape = 'u8[16384]{0}', space=vmem, size = 0x4000, scoped, tag = 'input window, operand 1']
    #allocation5 [shape = 's32[2]{0}', space=sflag, size = 0x8, scoped, tag = 'scoped memory for reconstruction_loss.1']
    #allocation6 [shape = 'u8[16384]{0}', space=vmem, size = 0x4000, scoped, tag = 'input window, operand 2']
    #allocation7 [shape = 's32[2]{0}', space=sflag, size = 0x8, scoped, tag = 'scoped memory for reconstruction_loss.1']
    %14 = vsyncpa [#allocation5], 0
    %s15 = scalar_lea.sflag [#allocation5], 1
    %16 = vsyncpa %s15, 0
    %17 = vsyncpa [#allocation7], 0
    %s18 = scalar_lea.sflag [#allocation7], 1
    %19 = vsyncpa %s18, 0
    loop: start=0, step=1, limit=4
    $region2: #{reconstruction_loss.1} parent=1 // loop_pre_header
      _
    $region3: #{reconstruction_loss.1} parent=1 // loop_header
      %s21 = sphi 0, %s25
      %p22 = scmp.ge.s32.totalorder %s21, 4
      %s28 = sphi 0, %s40
      %s29 = sphi 0, %s36
      %s30 = sphi 0, %s28
      %s31 = sphi 0, %s29
      %s32 = sphi 0, %s30
      %s33 = sphi 0, %s31
      %s45 = sphi 0, %s47
      %s48 = sphi 0, %s45
      %s49 = sphi 0, %s48
      %s65 = sphi 0, %s49
      %s73 = sphi 0, %s75
      %s76 = sphi 0, %s73
      %s77 = sphi 0, %s76
      %s93 = sphi 0, %s77
      %s99 = sphi 0, %s101
      %s102 = sphi 0, %s99
      %s103 = sphi 0, %s102
      %s119 = sphi 0, %s103
    $region4: #{reconstruction_loss.1} parent=1 // loop_header_branch
      %24 = sbr.rel (%p22) target = $region8
    $region5: #{reconstruction_loss.1} parent=1 // loop_body
      %s26 = ssub.s32 %s21, 1
      %s27 = ssub.s32 %s21, 2
      %s34 = sadd.s32 1, %s29
      %p35 = scmp.ge.s32.totalorder %s34, 1
      %s36 = scalar_select %p35, 0, %s34
      %s37 = sadd.s32 1, %s28
      %s38 = scalar_select %p35, %s37, %s28
      %p39 = scmp.ge.s32.totalorder %s38, 2
      %s40 = scalar_select %p39, 0, %s38
      %s41 = ssub.s32 %s28, %s40
      %s42 = ssub.s32 %s29, %s36
      %s43 = sor.u32 %s41, %s42
      %p44 = scmp.eq.s32.totalorder %s43, 0
      %s46 = sadd.s32 %s45, 1
      %s47 = scalar_select %p44, %s45, %s46
      %p50 = pneg %p44
      %p51 = scmp.eq.s32.totalorder %s21, 1
      %p52 = por %p50, %p51
      %p53 = scmp.ne.s32.totalorder %s45, %s48
      %p54 = scmp.eq.s32.totalorder %s21, 0
      %p55 = por %p53, %p54
      %p56 = scmp.ne.s32.totalorder %s45, %s48
      %p57 = scmp.eq.s32.totalorder %s26, 1
      %p58 = por %p56, %p57
      %p59 = scmp.ne.s32.totalorder %s48, %s49
      %p60 = scmp.eq.s32.totalorder %s26, 0
      %p61 = por %p59, %p60
      %p62 = scmp.ne.s32.totalorder %s48, %s49
      %p63 = scmp.eq.s32.totalorder %s27, 1
      %p64 = por %p62, %p63
      %p66 = scmp.ne.s32.totalorder %s49, %s65
      %p67 = scmp.eq.s32.totalorder %s27, 0
      %p68 = por %p66, %p67
      %s69 = ssub.s32 %s28, %s40
      %s70 = ssub.s32 %s29, %s36
      %s71 = sor.u32 %s69, %s70
      %p72 = scmp.eq.s32.totalorder %s71, 0
      %s74 = sadd.s32 %s73, 1
      %s75 = scalar_select %p72, %s73, %s74
      %p78 = pneg %p72
      %p79 = scmp.eq.s32.totalorder %s21, 1
      %p80 = por %p78, %p79
      %p81 = scmp.ne.s32.totalorder %s73, %s76
      %p82 = scmp.eq.s32.totalorder %s21, 0
      %p83 = por %p81, %p82
      %p84 = scmp.ne.s32.totalorder %s73, %s76
      %p85 = scmp.eq.s32.totalorder %s26, 1
      %p86 = por %p84, %p85
      %p87 = scmp.ne.s32.totalorder %s76, %s77
      %p88 = scmp.eq.s32.totalorder %s26, 0
      %p89 = por %p87, %p88
      %p90 = scmp.ne.s32.totalorder %s76, %s77
      %p91 = scmp.eq.s32.totalorder %s27, 1
      %p92 = por %p90, %p91
      %p94 = scmp.ne.s32.totalorder %s77, %s93
      %p95 = scmp.eq.s32.totalorder %s27, 0
      %p96 = por %p94, %p95
      %s97 = ssub.s32 %s28, %s40
      %p98 = scmp.eq.s32.totalorder %s97, 0
      %s100 = sadd.s32 %s99, 1
      %s101 = scalar_select %p98, %s99, %s100
      %p104 = pneg %p98
      %p105 = scmp.eq.s32.totalorder %s21, 1
      %p106 = por %p104, %p105
      %p107 = scmp.ne.s32.totalorder %s99, %s102
      %p108 = scmp.eq.s32.totalorder %s21, 0
      %p109 = por %p107, %p108
      %p110 = scmp.ne.s32.totalorder %s99, %s102
      %p111 = scmp.eq.s32.totalorder %s26, 1
      %p112 = por %p110, %p111
      %p113 = scmp.ne.s32.totalorder %s102, %s103
      %p114 = scmp.eq.s32.totalorder %s26, 0
      %p115 = por %p113, %p114
      %p116 = scmp.ne.s32.totalorder %s102, %s103
      %p117 = scmp.eq.s32.totalorder %s27, 1
      %p118 = por %p116, %p117
      %p120 = scmp.ne.s32.totalorder %s103, %s119
      %p121 = scmp.eq.s32.totalorder %s27, 0
      %p122 = por %p120, %p121
      %p123 = scmp.le.s32.totalorder 1, %s21
      %p124 = scmp.lt.s32.totalorder %s21, 3
      %p125 = pnand %p123, %p124
      %p126 = pneg %p125
      // Predicated region
      $region9: #{reconstruction_loss.1} parent=5 // pred_check
        _
      $region10: #{reconstruction_loss.1} parent=5 // pred_check_branch
        %128 = sbr.rel (%p125) target = $region12
      $region11: #{reconstruction_loss.1} parent=5 // pred_region
        %s129 = ssub.s32 %s21, 1
      $region12: #{reconstruction_loss.1} parent=5 // pred_fallthru
        _
      %p130 = scmp.lt.s32.totalorder %s21, 2
      // Predicated region
      $region13: #{reconstruction_loss.1} parent=5 // pred_check
        %p131 = pneg %p130
      $region14: #{reconstruction_loss.1} parent=5 // pred_check_branch
        %133 = sbr.rel (%p131) target = $region16
      $region15: #{reconstruction_loss.1} parent=5 // pred_region
        // Predicated region
        $region17: #{reconstruction_loss.1} parent=15 // pred_check
          %p134 = pneg %p55
        $region18: #{reconstruction_loss.1} parent=15 // pred_check_branch
          %136 = sbr.rel (%p134) target = $region20
        $region19: #{reconstruction_loss.1} parent=15 // pred_region
          %s137 = sand.u32 %s45, 1
          %s138 = scalar_lea.sflag [#allocation5], %s137
          %s139 = sand.u32 %s45, 1
          %s140 = smul.addr %s139, 16
          %s141 = scalar_lea.vmem [#allocation4], %s140
          %s142 = smul.u32 2, %s29
          %s144 = ssub.s32 256, 256
          %145 = vsyncadd %s138, %s144
          %s146 = smul.addr %s28, 2
          %s147 = sadd.s32 %s142, %s146
          %s148 = smul.addr %s147, 128
          %s149 = scalar_lea.hbm %s1, %s148
          %s150 = sshll.u32 %s141, 4
          %s151 = int_to_ptr.vmem [resolvable:$true] %s150
          %156 = dma.hbm_to_vmem [thread:$0]  %s149, 256, %s151, %s138, 128, 128, 8
        $region20: #{reconstruction_loss.1} parent=15 // pred_fallthru
          _
        // Predicated region
        $region21: #{reconstruction_loss.1} parent=15 // pred_check
          %p157 = pneg %p83
        $region22: #{reconstruction_loss.1} parent=15 // pred_check_branch
          %159 = sbr.rel (%p157) target = $region24
        $region23: #{reconstruction_loss.1} parent=15 // pred_region
          %s160 = sand.u32 %s73, 1
          %s161 = scalar_lea.sflag [#allocation7], %s160
          %s162 = sand.u32 %s73, 1
          %s163 = smul.addr %s162, 16
          %s164 = scalar_lea.vmem [#allocation6], %s163
          %s165 = smul.u32 2, %s29
          %s167 = ssub.s32 256, 256
          %168 = vsyncadd %s161, %s167
          %s169 = smul.addr %s28, 2
          %s170 = sadd.s32 %s165, %s169
          %s171 = smul.addr %s170, 128
          %s172 = scalar_lea.hbm %s2, %s171
          %s173 = sshll.u32 %s164, 4
          %s174 = int_to_ptr.vmem [resolvable:$true] %s173
          %179 = dma.hbm_to_vmem [thread:$0]  %s172, 256, %s174, %s161, 128, 128, 8
        $region24: #{reconstruction_loss.1} parent=15 // pred_fallthru
          _
      $region16: #{reconstruction_loss.1} parent=5 // pred_fallthru
        _
      %p180 = scmp.le.s32.totalorder 1, %s21
      %p181 = scmp.lt.s32.totalorder %s21, 3
      %p182 = pnand %p180, %p181
      %p183 = pneg %p182
      // Predicated region
      $region25: #{reconstruction_loss.1} parent=5 // pred_check
        _
      $region26: #{reconstruction_loss.1} parent=5 // pred_check_branch
        %185 = sbr.rel (%p182) target = $region28
      $region27: #{reconstruction_loss.1} parent=5 // pred_region
        %s186 = ssub.s32 %s21, 1
        %s187 = sand.u32 %s48, 1
        %s188 = scalar_lea.sflag [#allocation5], %s187
        %s189 = sand.u32 %s48, 1
        %s190 = smul.addr %s189, 16
        %s191 = scalar_lea.vmem [#allocation4], %s190
        // Predicated region
        $region29: #{reconstruction_loss.1} parent=27 // pred_check
          %p192 = pneg %p61
        $region30: #{reconstruction_loss.1} parent=27 // pred_check_branch
          %194 = sbr.rel (%p192) target = $region32
        $region31: #{reconstruction_loss.1} parent=27 // pred_region
          %195 = dma.done %s188, 256
        $region32: #{reconstruction_loss.1} parent=27 // pred_fallthru
          _
        %s196 = sand.u32 %s76, 1
        %s197 = scalar_lea.sflag [#allocation7], %s196
        %s198 = sand.u32 %s76, 1
        %s199 = smul.addr %s198, 16
        %s200 = scalar_lea.vmem [#allocation6], %s199
        // Predicated region
        $region33: #{reconstruction_loss.1} parent=27 // pred_check
          %p201 = pneg %p89
        $region34: #{reconstruction_loss.1} parent=27 // pred_check_branch
          %203 = sbr.rel (%p201) target = $region36
        $region35: #{reconstruction_loss.1} parent=27 // pred_region
          %204 = dma.done %s197, 256
        $region36: #{reconstruction_loss.1} parent=27 // pred_fallthru
          _
        %s205 = sand.u32 %s48, 1
        %s206 = scalar_lea.sflag [#allocation5], %s205
        %s207 = sand.u32 %s48, 1
        %s208 = smul.addr %s207, 16
        %s209 = scalar_lea.vmem [#allocation4], %s208
        %p210 = pneg %p61
        %p211 = pneg %p58
        %s212 = sand.u32 %s76, 1
        %s213 = scalar_lea.sflag [#allocation7], %s212
        %s214 = sand.u32 %s76, 1
        %s215 = smul.addr %s214, 16
        %s216 = scalar_lea.vmem [#allocation6], %s215
        %p217 = pneg %p89
        %p218 = pneg %p86
        %p219 = pneg %p115
        %p220 = pneg %p112
        %p221 = scmp.lt.s32.totalorder %s30, 1
        %s222 = scalar_select %p221, %s30, 1
        %s223 = smul.addr %s222, 8
        %s224 = scalar_lea.vmem %s3, %s223
        %s225 = smul.u32 2, %s31
        %s226 = smul.u32 2, %s31
        %p227 = scmp.lt.s32.totalorder %s30, 1
        %s228 = scalar_select %p227, %s30, 1
        %s229 = smul.addr %s228, 8
        %s230 = scalar_lea.vmem %s3, %s229
        %p231 = scmp.eq.s32.totalorder %s31, 0
        // Predicated region
        $region37: #{reconstruction_loss.1} parent=27 // pred_check
          %p232 = pneg %p231
        $region38: #{reconstruction_loss.1} parent=27 // pred_check_branch
          %234 = sbr.rel (%p232) target = $region40
        $region39: #{reconstruction_loss.1} parent=27 // pred_region
          %235 = vst [vmem:[%s230] sm:$0xff] 0.0
        $region40: #{reconstruction_loss.1} parent=27 // pred_fallthru
          _
        %v236 = vld [vmem:[%s191] sm:$0xff]
        %v237 = vld [vmem:[%s191 + $0x8] sm:$0xff]
        %v238 = vld [vmem:[%s200] sm:$0xff]
        %v239 = vld [vmem:[%s200 + $0x8] sm:$0xff]
        %v240 = vsub.f32 %v236, %v238
        %v241 = vsub.f32 %v237, %v239
        %v242 = vmul.f32 %v240, %v240
        %v243 = vmul.f32 %v241, %v241
        %v244 = vlaneseq
        %v245 = vshrl.u32 %v244, 7
        %v246 = vadd.s32 %v245, 8
        %s247 = sld [smem:[#allocation3 + %s30]]
        %v248 = vstv %s247
        %s249 = smul.u32 %s31, 16
        %v250 = vstv %s249
        %v251 = vsub.s32 %v248, %v250
        %vm252 = vcmp.lt.s32.totalorder %v245, %v251
        %vm253 = vcmp.lt.s32.totalorder %v246, %v251
        %v254 = vsel %vm252, 1, 0
        %v255 = vsel %vm253, 1, 0
        %vm256 = vcmp.eq.s32.totalorder %v254, 1
        %vm257 = vcmp.eq.s32.totalorder %v255, 1
        %v258 = vsel %vm256, %v242, 0.0
        %v259 = vsel %vm257, %v243, 0.0
        %v260 = vld [vmem:[%s230] sm:$0xff]
        %v261 = vadd.f32 %v258, %v259
        %v262 = vadd.f32 %v260, %v261
        %263 = vst [vmem:[%s230] sm:$0xff] %v262
        %p264 = scmp.lt.s32.totalorder %s30, 1
        %s265 = scalar_select %p264, %s30, 1
        %s266 = smul.addr %s265, 8
        %s267 = scalar_lea.vmem %s3, %s266
        // Predicated region
        $region41: #{reconstruction_loss.1} parent=27 // pred_check
          %p268 = pneg %p112
        $region42: #{reconstruction_loss.1} parent=27 // pred_check_branch
          %270 = sbr.rel (%p268) target = $region44
        $region43: #{reconstruction_loss.1} parent=27 // pred_region
          _
        $region44: #{reconstruction_loss.1} parent=27 // pred_fallthru
          _
      $region28: #{reconstruction_loss.1} parent=5 // pred_fallthru
        _
      %p271 = scmp.le.s32.totalorder 2, %s21
      // Predicated region
      $region45: #{reconstruction_loss.1} parent=5 // pred_check
        %p272 = pneg %p271
      $region46: #{reconstruction_loss.1} parent=5 // pred_check_branch
        %274 = sbr.rel (%p272) target = $region48
      $region47: #{reconstruction_loss.1} parent=5 // pred_region
        %s275 = ssub.s32 %s21, 2
        // Predicated region
        $region49: #{reconstruction_loss.1} parent=47 // pred_check
          %p276 = pneg %p118
        $region50: #{reconstruction_loss.1} parent=47 // pred_check_branch
          %278 = sbr.rel (%p276) target = $region52
        $region51: #{reconstruction_loss.1} parent=47 // pred_region
          %p279 = scmp.lt.s32.totalorder %s32, 1
          %s280 = scalar_select %p279, %s32, 1
          %s281 = smul.addr %s280, 8
          %s282 = scalar_lea.vmem %s3, %s281
        $region52: #{reconstruction_loss.1} parent=47 // pred_fallthru
          _
      $region48: #{reconstruction_loss.1} parent=5 // pred_fallthru
        _
    $region6: #{reconstruction_loss.1} parent=1 // loop_footer
      %s25 = sadd.s32 1, %s21
    $region7: #{reconstruction_loss.1} parent=1 // loop_footer_branch
      %20 = sbr.rel target = $region3
    $region8: #{reconstruction_loss.1} parent=1 // loop_exit
      _
    %283 = vsyncpa [#allocation5], 1
    %s284 = scalar_lea.sflag [#allocation5], 1
    %285 = vsyncpa %s284, 1
    %286 = vsyncpa [#allocation7], 1
    %s287 = scalar_lea.sflag [#allocation7], 1
    %288 = vsyncpa %s287, 1

</llo_original>
